<compile_context>
chip_gen: v7x
topology: tpu7x:2x2x1
jax: 0.10.0
libtpu: 0.0.40
codegen_flags: <defaults>
</compile_context>

<pallas_src>
import math
import functools

import jax
import jax.numpy as jnp
from jax.experimental import pallas as pl
from jax.experimental.pallas import tpu as pltpu


# ---------------------------------------------------------------------------
# pe table construction (parameter setup, plain JAX -- mirrors __init__)
# ---------------------------------------------------------------------------
def make_pe_table(d_model: int, max_len: int = 5000) -> jnp.ndarray:
    position = jnp.arange(0, max_len, dtype=jnp.float32)[:, None]          # [L, 1]
    div_term = jnp.exp(
        jnp.arange(0, d_model, 2, dtype=jnp.float32)
        * (-math.log(10000.0) / d_model)
    )                                                                       # [D/2]
    pe = jnp.zeros((max_len, d_model), dtype=jnp.float32)
    pe = pe.at[:, 0::2].set(jnp.sin(position * div_term))
    pe = pe.at[:, 1::2].set(jnp.cos(position * div_term))
    return pe                                                               # [L, D]


# ---------------------------------------------------------------------------
# kernels
# ---------------------------------------------------------------------------
def _pe_add_flat_kernel(x_ref, pe_ref, o_ref, *, reps):
    # x_ref/o_ref: [ts, B*D]   pe_ref: [ts, D]
    # Lane-dense single store; pe replicated across B on the lane axis.
    o_ref[...] = x_ref[...] + jnp.tile(pe_ref[...], (1, reps))


def _pe_add_dropout_flat_kernel(x_ref, pe_ref, m_ref, o_ref, *, reps):
    # m_ref already holds 0 or 1/(1-p) in x.dtype (inverted dropout).
    o_ref[...] = (x_ref[...] + jnp.tile(pe_ref[...], (1, reps))) * m_ref[...]


def _pe_add_3d_kernel(x_ref, pe_ref, o_ref):
    # x_ref/o_ref: [ts, tb, D]   pe_ref: [ts, 1, D] (sublane broadcast)
    o_ref[...] = x_ref[...] + pe_ref[...]


def _pe_add_dropout_3d_kernel(x_ref, pe_ref, m_ref, o_ref):
    o_ref[...] = (x_ref[...] + pe_ref[...]) * m_ref[...]


# ---------------------------------------------------------------------------
# wrapper
# ---------------------------------------------------------------------------
_VMEM_LIMIT_BYTES = 48 * 1024 * 1024   # safe on v5e/v6e (128 MiB) and v7x (64 MiB/TC)


def positional_encoding(
    x: jnp.ndarray,
    pe_table: jnp.ndarray,
    *,
    p: float = 0.1,
    training: bool = False,
    rng_key: jax.Array | None = None,
) -> jnp.ndarray:
    """x: [S, B, D].  Returns dropout(x + pe[:S]) (pe broadcast over batch)."""
    S, B, D = x.shape
    L = pe_table.shape[0]
    dtype = x.dtype
    itemsize = jnp.dtype(dtype).itemsize

    if training and p >= 1.0:                     # nn.Dropout(p=1) zeroes everything
        return jnp.zeros((S, B, D), dtype=dtype)
    use_dropout = training and p > 0.0

    mask = None
    if use_dropout:
        if rng_key is None:
            rng_key = jax.random.PRNGKey(0)
        keep = jax.random.bernoulli(rng_key, 1.0 - p, (S, B, D))
        mask = keep.astype(dtype) * jnp.asarray(1.0 / (1.0 - p), dtype=dtype)
        target_bytes = 4 << 20                    # 3 streams per step (x, mask, out)
    else:
        target_bytes = 8 << 20                    # 2 streams per step (x, out)

    F = B * D
    row_bytes = F * itemsize

    # -----------------------------------------------------------------------
    # Path A: flattened [S, B*D] layout, 1-D grid over S (lane/sublane dense).
    # -----------------------------------------------------------------------
    if S * row_bytes <= target_bytes or 8 * row_bytes <= target_bytes:
        if S * row_bytes <= target_bytes:
            ts = S                                # whole tensor, single block
        else:
            ts = min(S, ((target_bytes // row_bytes) // 8) * 8)  # multiple of 8
        n_blocks = pl.cdiv(S, ts)

        if ts % 8 != 0 or ts == S:
            # single-block case: pe block first dim must equal the full array dim.
            pe_arr = pe_table[:S]
        elif n_blocks * ts <= L:
            pe_arr = pe_table                     # rows selected by index_map
        else:
            # S close to max_len and not divisible: pad so edge blocks stay in-bounds.
            pe_arr = jnp.pad(pe_table, ((0, n_blocks * ts - L), (0, 0)))
        pe_arr = pe_arr.astype(dtype)

        x2 = x.reshape(S, F)                      # free: contiguous [S, B, D]
        out_shape2 = jax.ShapeDtypeStruct((S, F), dtype)
        x_spec = pl.BlockSpec((ts, F), lambda i: (i, 0))
        pe_spec = pl.BlockSpec((ts, D), lambda i: (i, 0))
        compiler_params = pltpu.CompilerParams(
            dimension_semantics=("parallel",),    # NOTE: consider CORE_PARALLEL on v7x
            vmem_limit_bytes=_VMEM_LIMIT_BYTES,
        )

        if not use_dropout:
            out2 = pl.pallas_call(
                functools.partial(_pe_add_flat_kernel, reps=B),
                grid=(n_blocks,),
                in_specs=[x_spec, pe_spec],
                out_specs=x_spec,
                out_shape=out_shape2,
                compiler_params=compiler_params,
            )(x2, pe_arr)
        else:
            out2 = pl.pallas_call(
                functools.partial(_pe_add_dropout_flat_kernel, reps=B),
                grid=(n_blocks,),
                in_specs=[x_spec, pe_spec, x_spec],
                out_specs=x_spec,
                out_shape=out_shape2,
                compiler_params=compiler_params,
            )(x2, pe_arr, mask.reshape(S, F))
        return out2.reshape(S, B, D)

    # -----------------------------------------------------------------------
    # Path B: large rows (B*D too big for a multi-row flat tile):
    # keep [S, B, D], 2-D grid over (S, B); pe as [L, 1, D] sublane broadcast.
    # -----------------------------------------------------------------------
    if B >= 8:
        tb_cap = max(8, ((target_bytes // max(1, D * itemsize)) // 8) * 8)
        tb = B if B <= tb_cap else tb_cap         # tb == B (full) or multiple of 8
    else:
        tb = B
    # TODO(synk): D is never tiled; for pathologically huge D a single
    #             (1, tb, D) block may exceed the VMEM budget.
    ts = max(1, target_bytes // max(1, tb * D * itemsize))
    ts = min(ts, S)
    ns, nb = pl.cdiv(S, ts), pl.cdiv(B, tb)

    if ns * ts <= L:
        pe_arr = pe_table
    else:
        pe_arr = jnp.pad(pe_table, ((0, ns * ts - L), (0, 0)))
    pe3 = pe_arr.reshape(-1, 1, D).astype(dtype)

    out_shape3 = jax.ShapeDtypeStruct((S, B, D), dtype)
    x_spec = pl.BlockSpec((ts, tb, D), lambda i, j: (i, j, 0))
    pe_spec = pl.BlockSpec((ts, 1, D), lambda i, j: (i, 0, 0))
    compiler_params = pltpu.CompilerParams(
        dimension_semantics=("parallel", "parallel"),
        vmem_limit_bytes=_VMEM_LIMIT_BYTES,
    )

    if not use_dropout:
        return pl.pallas_call(
            _pe_add_3d_kernel,
            grid=(ns, nb),
            in_specs=[x_spec, pe_spec],
            out_specs=x_spec,
            out_shape=out_shape3,
            compiler_params=compiler_params,
        )(x, pe3)
    return pl.pallas_call(
        _pe_add_dropout_3d_kernel,
        grid=(ns, nb),
        in_specs=[x_spec, pe_spec, x_spec],
        out_specs=x_spec,
        out_shape=out_shape3,
        compiler_params=compiler_params,
    )(x, pe3, mask)


# ---------------------------------------------------------------------------
# main
# ---------------------------------------------------------------------------
if __name__ == "__main__":
    S, B, D = 8, 2, 32            # seq_len, batch, d_model
    key = jax.random.PRNGKey(0)
    kx, kdrop = jax.random.split(key)
    x = jax.random.normal(kx, (S, B, D), dtype=jnp.float32)

    pe_table = make_pe_table(d_model=D, max_len=5000)
    ref = x + pe_table[:S][:, None, :]

    # eval-mode forward (dropout = identity).
    out = positional_encoding(x, pe_table, p=0.1, training=False)
    out = jax.block_until_ready(out)
    assert out.shape == (S, B, D)
    assert jnp.allclose(out, ref, atol=1e-5, rtol=1e-5), "eval-mode mismatch"

    # training-mode forward (inverted dropout, mask drawn in the wrapper).
    p = 0.1
    out_tr = positional_encoding(x, pe_table, p=p, training=True, rng_key=kdrop)
    out_tr = jax.block_until_ready(out_tr)
    assert out_tr.shape == (S, B, D)
    keep = jax.random.bernoulli(kdrop, 1.0 - p, (S, B, D))
    mask = keep.astype(jnp.float32) * jnp.float32(1.0 / (1.0 - p))
    ref_tr = ref * mask
    assert jnp.allclose(out_tr, ref_tr, atol=1e-5, rtol=1e-5), "training-mode mismatch"

    print("KERNEL_OK")
</pallas_src>

<mosaic_0001>
module attributes {stable_mosaic.version = 11 : i64} {
  func.func @_pe_add_flat_kernel(%arg0: i32, %arg1: memref<8x64xf32, #tpu.memory_space<vmem>>, %arg2: memref<8x32xf32, #tpu.memory_space<vmem>>, %arg3: memref<8x64xf32, #tpu.memory_space<vmem>>) attributes {dimension_semantics = [#tpu.dimension_semantics<parallel>], iteration_bounds = array<i64: 1>, scalar_prefetch = 0 : i64, scratch_operands = 0 : i64, tpu.core_type = #tpu.core_type<tc>, window_params = [{transform_indices = @transform_0, window_bounds = array<i64: 8, 64>}, {transform_indices = @transform_1, window_bounds = array<i64: 8, 32>}, {transform_indices = @transform_2, window_bounds = array<i64: 8, 64>}]} {
    %c0 = arith.constant 0 : index
    %c0_0 = arith.constant 0 : index
    %0 = vector.load %arg1[%c0, %c0_0] : memref<8x64xf32, #tpu.memory_space<vmem>>, vector<8x64xf32>
    %c0_1 = arith.constant 0 : index
    %c0_2 = arith.constant 0 : index
    %1 = vector.load %arg2[%c0_1, %c0_2] : memref<8x32xf32, #tpu.memory_space<vmem>>, vector<8x32xf32>
    %2 = tpu.concatenate %1, %1 in 1 : vector<8x32xf32>, vector<8x32xf32> -> vector<8x64xf32>
    %3 = arith.addf %0, %2 : vector<8x64xf32>
    %c0_3 = arith.constant 0 : index
    %c0_4 = arith.constant 0 : index
    %4 = vector.load %arg3[%c0_3, %c0_4] : memref<8x64xf32, #tpu.memory_space<vmem>>, vector<8x64xf32>
    tpu.vector_store %arg3[%c0_3, %c0_4], %3 {strides = array<i32>} : memref<8x64xf32, #tpu.memory_space<vmem>>, vector<8x64xf32>,
    return
  }
  func.func @transform_0(%arg0: i32) -> (i32, i32) {
    %c0_i32 = arith.constant 0 : i32
    %c0_i32_0 = arith.constant 0 : i32
    return %arg0, %c0_i32 : i32, i32
  }
  func.func @transform_1(%arg0: i32) -> (i32, i32) {
    %c0_i32 = arith.constant 0 : i32
    %c0_i32_0 = arith.constant 0 : i32
    return %arg0, %c0_i32 : i32, i32
  }
  func.func @transform_2(%arg0: i32) -> (i32, i32) {
    %c0_i32 = arith.constant 0 : i32
    %c0_i32_0 = arith.constant 0 : i32
    return %arg0, %c0_i32 : i32, i32
  }
}

</mosaic_0001>

<llo_original>
// kernel: tpu_custom_call.1
$region0: #{tpu_custom_call.1}
  #allocation0 [shape = 'u32[]', space=smem, size = 0x4, offset = 0x4, fixed_abs, tag = 'smem constant byte address 0x4 - core index']
  #allocation1 [shape = 'u32[144,128]{1,0:T(1,128)}', space=vmem, size = 0x12000, scoped, tag = 'internal scratch']
  %s0 = inlined_call_operand.hbm [shape: f32[8,64], index: 0, kind: input, shape index: {}]
  %s1 = inlined_call_operand.hbm [shape: f32[8,32], index: 1, kind: input, shape index: {}]
  %s2 = inlined_call_operand.hbm [shape: f32[8,64], index: 2, kind: output, shape index: {}]
  %s3 = sld [smem:[#allocation0]]
  $region26: #{tpu_custom_call.1} parent=0
    _
  %s5 = ssub.s32 1, %s3
  %s6 = scalar_select 0, %s5, %s3
  $region1: #{tpu_custom_call.1} parent=0
    #allocation2 [shape = 'u8[4096]{0}', space=vmem, size = 0x1000, scoped, tag = 'input window, operand 0, single buffered']
    #allocation3 [shape = 's32[1]{0}', space=sflag, size = 0x4, scoped, tag = 'scoped memory for tpu_custom_call.1']
    #allocation4 [shape = 's32[1]{0}', space=sflag, size = 0x4, scoped, tag = 'scoped memory for tpu_custom_call.1']
    #allocation5 [shape = 'u8[4096]{0}', space=vmem, size = 0x1000, scoped, tag = 'input window, operand 1, single buffered']
    #allocation6 [shape = 's32[1]{0}', space=sflag, size = 0x4, scoped, tag = 'scoped memory for tpu_custom_call.1']
    #allocation7 [shape = 'u8[4096]{0}', space=vmem, size = 0x1000, scoped, tag = 'output window, operand 0, single buffered']
    %7 = vsyncpa [#allocation3], 0
    %8 = vsyncpa [#allocation6], 0
    %9 = vsyncpa [#allocation4], 0
    // Predicated region
    $region2: #{tpu_custom_call.1} parent=1 // pred_check
      _
    $region3: #{tpu_custom_call.1} parent=1 // pred_check_branch
      %11 = sbr.rel (0) target = $region5
    $region4: #{tpu_custom_call.1} parent=1 // pred_region
      %s13 = ssub.s32 128, 128
      %14 = vsyncadd [#allocation3], %s13
      %s16 = sshll.u32 [#allocation2], 4
      %s17 = int_to_ptr.vmem [resolvable:$true] %s16
      %19 = dma.hbm_to_vmem [thread:$0]  %s0, 128, %s17, [#allocation3]
    $region5: #{tpu_custom_call.1} parent=1 // pred_fallthru
      _
    // Predicated region
    $region6: #{tpu_custom_call.1} parent=1 // pred_check
      _
    $region7: #{tpu_custom_call.1} parent=1 // pred_check_branch
      %21 = sbr.rel (0) target = $region9
    $region8: #{tpu_custom_call.1} parent=1 // pred_region
      %s23 = ssub.s32 128, 128
      %24 = vsyncadd [#allocation6], %s23
      %s26 = sshll.u32 [#allocation5], 4
      %s27 = int_to_ptr.vmem [resolvable:$true] %s26
      %29 = dma.hbm_to_vmem [thread:$0]  %s1, 128, %s27, [#allocation6]
    $region9: #{tpu_custom_call.1} parent=1 // pred_fallthru
      _
    // Predicated region
    $region10: #{tpu_custom_call.1} parent=1 // pred_check
      _
    $region11: #{tpu_custom_call.1} parent=1 // pred_check_branch
      %31 = sbr.rel (0) target = $region13
    $region12: #{tpu_custom_call.1} parent=1 // pred_region
      %32 = dma.done [#allocation3], 128
    $region13: #{tpu_custom_call.1} parent=1 // pred_fallthru
      _
    // Predicated region
    $region14: #{tpu_custom_call.1} parent=1 // pred_check
      _
    $region15: #{tpu_custom_call.1} parent=1 // pred_check_branch
      %34 = sbr.rel (0) target = $region17
    $region16: #{tpu_custom_call.1} parent=1 // pred_region
      %35 = dma.done [#allocation6], 128
    $region17: #{tpu_custom_call.1} parent=1 // pred_fallthru
      _
    %v36 = vld [vmem:[#allocation2] sm:$0xff]
    %v37 = vld [vmem:[#allocation5] sm:$0xff]
    %39 = vrot.lane.b32.xlu0 %v37, 32
    %v40 = vpop.permute.xlu0 %39
    %vm42 = vcmask 261120
    %v43 = vsel %vm42, %v37, %v40
    %v44 = vadd.f32 %v36, %v43
    %vm45 = vcmask 523264
    %46 = vst.msk [vmem:[#allocation7] sm:$0xff] %vm45, %v44
    // Predicated region
    $region18: #{tpu_custom_call.1} parent=1 // pred_check
      _
    $region19: #{tpu_custom_call.1} parent=1 // pred_check_branch
      %48 = sbr.rel (0) target = $region21
    $region20: #{tpu_custom_call.1} parent=1 // pred_region
      %s50 = ssub.s32 128, 128
      %51 = vsyncadd [#allocation4], %s50
      %s53 = sshll.u32 [#allocation7], 4
      %s54 = int_to_ptr.vmem [resolvable:$true] %s53
      %56 = dma.vmem_to_hbm [thread:$0]  %s54, 128, %s2, [#allocation4]
    $region21: #{tpu_custom_call.1} parent=1 // pred_fallthru
      _
    // Predicated region
    $region22: #{tpu_custom_call.1} parent=1 // pred_check
      _
    $region23: #{tpu_custom_call.1} parent=1 // pred_check_branch
      %58 = sbr.rel (0) target = $region25
    $region24: #{tpu_custom_call.1} parent=1 // pred_region
      %59 = dma.done [#allocation4], 128
    $region25: #{tpu_custom_call.1} parent=1 // pred_fallthru
      _
    %60 = vsyncpa [#allocation3], 1
    %61 = vsyncpa [#allocation6], 1
    %62 = vsyncpa [#allocation4], 1

</llo_original>
